<compile_context>
chip_gen: v7x
topology: tpu7x:2x2x1
jax: 0.10.0
libtpu: 0.0.40
codegen_flags: <defaults>
</compile_context>

<pallas_src>
import math
import numpy as np
import jax
import jax.numpy as jnp
from jax import lax
from jax.experimental import pallas as pl
from jax.experimental.pallas import tpu as pltpu


LANE = 128  # TPU lane width; node and feature axes padded to this


def _ceil_to(x, m):
    return ((x + m - 1) // m) * m


def _pick_tile(n, candidates=(512, 256, 128)):
    for t in candidates:
        if n % t == 0:
            return t
    return n


def _vmem_limit_bytes():
    # v5e/v6e have 128 MiB physical VMEM -> allow large tiles; v7x only has
    # 64 MiB, so cap lower there.  Fallback (unknown chip) stays v7x-safe.
    try:
        cap = int(pltpu.get_tpu_info().vmem_capacity_bytes)
        return int(min(cap * 3 // 4, 100 * 1024 * 1024))
    except Exception:
        return 48 * 1024 * 1024


# ----------------------------------------------------------------------------
# Kernel 0: per-meta-path node projection Wh and attention logits el / er.
# ----------------------------------------------------------------------------
def make_proj_kernel(num_heads):
    H = num_heads

    def proj_kernel(h_ref, w_ref, alr_ref, wh_ref, elt_ref, er_ref):
        # MXU (bf16, f32 acc); W is pre-padded to PAD_F columns -> Wh lane dense.
        Wh = jnp.dot(h_ref[...], w_ref[0], preferred_element_type=jnp.float32)
        # All per-head logits in one matmul via block-diagonal [A_l | A_r].
        el_er = jnp.dot(Wh, alr_ref[0], preferred_element_type=jnp.float32)  # (N,2H)
        wh_ref[0] = Wh.astype(jnp.bfloat16)
        lr_t = el_er.T                           # single (N,2H)->(2H,N) relayout
        elt_ref[0] = lr_t[:H, :]                 # e_l, already (H, N) for the GAT kernel
        er_ref[0] = el_er[:, H:]                 # e_r, (N, H), sliced per dst tile

    return proj_kernel


def node_projection(h_pad_bf, W_pad_bf, A_lr_pad, num_heads, vmem_limit):
    M = W_pad_bf.shape[0]
    N_pad, F_in = h_pad_bf.shape
    PAD_F = W_pad_bf.shape[2]
    H = num_heads
    return pl.pallas_call(
        make_proj_kernel(H),
        out_shape=(jax.ShapeDtypeStruct((M, N_pad, PAD_F), jnp.bfloat16),
                   jax.ShapeDtypeStruct((M, H, N_pad), jnp.float32),
                   jax.ShapeDtypeStruct((M, N_pad, H), jnp.float32)),
        grid=(M,),
        in_specs=[
            pl.BlockSpec((N_pad, F_in), lambda m: (0, 0)),
            pl.BlockSpec((1, F_in, PAD_F), lambda m: (m, 0, 0)),
            pl.BlockSpec((1, PAD_F, 2 * H), lambda m: (m, 0, 0)),
        ],
        out_specs=(
            pl.BlockSpec((1, N_pad, PAD_F), lambda m: (m, 0, 0)),
            pl.BlockSpec((1, H, N_pad), lambda m: (m, 0, 0)),
            pl.BlockSpec((1, N_pad, H), lambda m: (m, 0, 0)),
        ),
        compiler_params=pltpu.CompilerParams(
            dimension_semantics=("parallel",),
            vmem_limit_bytes=vmem_limit),
    )(h_pad_bf, W_pad_bf, A_lr_pad)


# ----------------------------------------------------------------------------
# Kernel 1: GAT scores / softmax / aggregation per (meta-path, dst-tile).
# ----------------------------------------------------------------------------
def make_gat_kernel(num_heads, out_feats, tile_dst, n_pad, pad_f,
                    negative_slope=0.2):
    H, D, TILE, N_SRC, PAD_F = num_heads, out_feats, tile_dst, n_pad, pad_f

    def gat_kernel(adj_ref, wh_ref, elt_ref, er_ref, bias_ref, proj_ref,
                   z_ref, wv_ref):
        mask = adj_ref[0] > 0                       # (TILE, N_SRC) from int8 adjacency
        wh = wh_ref[0]                              # (N_SRC, PAD_F) bf16 (zero pad cols)
        el_all = elt_ref[0]                         # (H, N_SRC)  f32
        er_all = er_ref[0]                          # (TILE, H)   f32
        bias = bias_ref[0]                          # (1, PAD_F)  f32
        neg = jnp.float32(-1e30)
        slope = jnp.float32(negative_slope)

        # --- per-head attention (full 128-lane vregs: N_SRC % 128 == 0) ------
        alphas = []
        for hd in range(H):
            s = er_all[:, hd:hd + 1] + el_all[hd:hd + 1, :]   # (TILE, N_SRC)
            s = jnp.maximum(s, slope * s)                     # LeakyReLU
            s = jnp.where(mask, s, neg)
            mx = jnp.max(s, axis=-1, keepdims=True)
            # Self-loops guarantee a finite mx per real row, so masked entries
            # underflow to exactly 0 -- no second mask needed.
            p = jnp.exp(s - mx)
            denom = jnp.sum(p, axis=-1, keepdims=True)
            alphas.append(p * pl.reciprocal(denom, approx=True))   # EUP, not VALU div
        P = jnp.concatenate(alphas, axis=1).astype(jnp.bfloat16)   # (TILE, H*N_SRC)

        # --- fused aggregation: one wide MXU matmul over all heads -----------
        # block_diag(Wh_0,...,Wh_{H-1}) built from column masks of the padded Wh.
        col = lax.broadcasted_iota(jnp.int32, (1, PAD_F), 1)
        blocks = [jnp.where((col >= hd * D) & (col < (hd + 1) * D),
                            wh, jnp.zeros_like(wh)) for hd in range(H)]
        wh_blk = jnp.concatenate(blocks, axis=0)            # (H*N_SRC, PAD_F) bf16

        z = jnp.dot(P, wh_blk, preferred_element_type=jnp.float32)  # (TILE, PAD_F)
        z = z + bias
        # ELU (alpha=1): x if x>0 else exp(x)-1   (pad columns stay exactly 0)
        z = jnp.where(z > 0, z, jnp.exp(jnp.minimum(z, 0.0)) - 1.0)
        z_ref[0] = z.astype(jnp.bfloat16)                   # lane-dense bf16 store

        # --- semantic-attention logit per dst node, while z is still in VMEM -
        W1p = proj_ref[0:PAD_F, :]                          # (PAD_F, HID), zero pad rows
        b1 = proj_ref[PAD_F:PAD_F + 1, :]                   # (1, HID)
        w2 = proj_ref[PAD_F + 1:PAD_F + 2, :]               # (1, HID) == W2^T
        t = jnp.tanh(jnp.dot(z, W1p, preferred_element_type=jnp.float32) + b1)
        wv_ref[0] = jnp.sum(t * w2, axis=-1, keepdims=True)  # (TILE, 1)

    return gat_kernel


def gat_attention(adj_i8, wh, elt, er, bias_pad, proj_pack,
                  num_heads, out_feats, tile_dst, vmem_limit):
    M, N_pad, _ = adj_i8.shape
    PAD_F = wh.shape[2]
    HID = proj_pack.shape[1]
    H = num_heads
    n_tiles = N_pad // tile_dst
    kernel = make_gat_kernel(H, out_feats, tile_dst, N_pad, PAD_F)
    return pl.pallas_call(
        kernel,
        out_shape=(jax.ShapeDtypeStruct((M, N_pad, PAD_F), jnp.bfloat16),
                   jax.ShapeDtypeStruct((M, N_pad, 1), jnp.float32)),
        grid=(M, n_tiles),
        in_specs=[
            pl.BlockSpec((1, tile_dst, N_pad), lambda m, j: (m, j, 0)),   # adj^T int8
            pl.BlockSpec((1, N_pad, PAD_F), lambda m, j: (m, 0, 0)),      # Wh bf16
            pl.BlockSpec((1, H, N_pad), lambda m, j: (m, 0, 0)),          # e_l (H,N)
            pl.BlockSpec((1, tile_dst, H), lambda m, j: (m, j, 0)),       # e_r tile
            pl.BlockSpec((1, 1, PAD_F), lambda m, j: (m, 0, 0)),          # bias (padded)
            pl.BlockSpec((PAD_F + 2, HID), lambda m, j: (0, 0)),          # packed proj
        ],
        out_specs=(
            pl.BlockSpec((1, tile_dst, PAD_F), lambda m, j: (m, j, 0)),   # z bf16
            pl.BlockSpec((1, tile_dst, 1), lambda m, j: (m, j, 0)),       # per-node wv
        ),
        compiler_params=pltpu.CompilerParams(
            dimension_semantics=("parallel", "parallel"),
            vmem_limit_bytes=vmem_limit),
    )(adj_i8, wh, elt, er, bias_pad, proj_pack)


# ----------------------------------------------------------------------------
# Kernel 2: beta-weighted sum of the meta-path embeddings (tiled over nodes).
# ----------------------------------------------------------------------------
def make_combine_kernel(num_meta_paths):
    M = num_meta_paths

    def combine_kernel(beta_ref, z_ref, out_ref):
        acc = beta_ref[0] * z_ref[0].astype(jnp.float32)
        for m in range(1, M):
            acc = acc + beta_ref[m] * z_ref[m].astype(jnp.float32)
        out_ref[...] = acc

    return combine_kernel


def semantic_combine(z_pad, beta, vmem_limit):
    M, N_pad, PAD_F = z_pad.shape
    tile_n = _pick_tile(N_pad)
    return pl.pallas_call(
        make_combine_kernel(M),
        out_shape=jax.ShapeDtypeStruct((N_pad, PAD_F), jnp.float32),
        grid_spec=pltpu.PrefetchScalarGridSpec(
            num_scalar_prefetch=1,                # beta -> SMEM scalars
            grid=(N_pad // tile_n,),
            in_specs=[pl.BlockSpec((M, tile_n, PAD_F), lambda i, b: (0, i, 0))],
            out_specs=pl.BlockSpec((tile_n, PAD_F), lambda i, b: (i, 0)),
        ),
        compiler_params=pltpu.CompilerParams(
            dimension_semantics=("parallel",),
            vmem_limit_bytes=vmem_limit),
    )(beta, z_pad)


# ----------------------------------------------------------------------------
# HANLayer forward
# ----------------------------------------------------------------------------
def han_layer(adj, h, params, num_heads, out_feats):
    M, N, _ = adj.shape
    H, D = num_heads, out_feats
    HD = H * D
    HID = params["W1"].shape[1]
    PAD_F = _ceil_to(HD, LANE)         # lane-dense embedding width
    N_pad = _ceil_to(N, LANE)          # lane-dense node axis (full-lane score vregs)
    TILE_DST = _pick_tile(N_pad)
    vmem_limit = _vmem_limit_bytes()

    # --- wrapper-side layout plumbing (no per-node compute hoisted here) ---
    h_pad = jnp.zeros((N_pad, h.shape[1]), h.dtype).at[:N].set(h).astype(jnp.bfloat16)

    # adjacency -> (dst, src) orientation, int8 0/1 (compared only, never MXU),
    # zero-padded to N_pad (padded rows/cols are fully masked inside the kernel).
    adj_t01 = (jnp.transpose(adj, (0, 2, 1)) > 0).astype(jnp.int8)
    adj_i8 = jnp.zeros((M, N_pad, N_pad), jnp.int8).at[:, :N, :N].set(adj_t01)

    # W zero-padded to PAD_F output columns -> Wh comes out lane dense.
    W_pad = jnp.zeros((M, h.shape[1], PAD_F), jnp.float32).at[:, :, :HD].set(params["W"])
    W_pad_bf = W_pad.astype(jnp.bfloat16)

    # Block-diagonal attention matrices:  Wh @ [A_l | A_r] = [e_l | e_r]
    blk = jnp.repeat(jnp.eye(H, dtype=jnp.float32), D, axis=0)        # (HD, H)
    A_l = blk[None] * params["attn_l"].reshape(M, HD, 1)              # (M, HD, H)
    A_r = blk[None] * params["attn_r"].reshape(M, HD, 1)
    A_lr = jnp.concatenate([A_l, A_r], axis=-1)                       # (M, HD, 2H)
    A_lr_pad = jnp.zeros((M, PAD_F, 2 * H), jnp.float32).at[:, :HD].set(A_lr)

    bias_pad = jnp.zeros((M, 1, PAD_F), jnp.float32).at[:, :, :HD].set(params["bias"])
    W1_pad = jnp.zeros((PAD_F, HID), jnp.float32).at[:HD].set(params["W1"])
    proj_pack = jnp.concatenate([W1_pad, params["b1"], params["W2"].T], axis=0)

    # Kernel 0: per-meta-path projection (Wh, e_l^T, e_r), once per meta-path.
    wh, elt, er = node_projection(h_pad, W_pad_bf, A_lr_pad, H, vmem_limit)

    # Kernel 1: GAT attention + aggregation + ELU + semantic logits.
    z_pad, wv = gat_attention(adj_i8, wh, elt, er, bias_pad, proj_pack,
                              H, D, TILE_DST, vmem_limit)

    # Semantic-attention softmax over M scalar scores -- done in the wrapper.
    scores = jnp.sum(wv[:, :N, 0], axis=1) * (1.0 / N)                # (M,)
    beta = jax.nn.softmax(scores).astype(jnp.float32)                 # (M,)

    # Kernel 2: beta-weighted sum over meta-paths, tiled over nodes.
    out_pad = semantic_combine(z_pad, beta, vmem_limit)               # (N_pad, PAD_F)
    return out_pad[:N, :HD]


# ----------------------------------------------------------------------------
# Pure-JAX reference (mirrors the PyTorch forward semantics, full f32)
# ----------------------------------------------------------------------------
def han_reference(adj, h, params, num_heads, out_feats):
    M, N, _ = adj.shape
    H, D = num_heads, out_feats
    embs = []
    for m in range(M):
        Wh = h @ params["W"][m]                                  # (N, H*D)
        Wh_hd = Wh.reshape(N, H, D)
        al = params["attn_l"][m].reshape(1, H, D)
        ar = params["attn_r"][m].reshape(1, H, D)
        el = (Wh_hd * al).sum(-1)                                # (N, H)
        er = (Wh_hd * ar).sum(-1)
        s = el[:, None, :] + er[None, :, :]                      # (Nsrc, Ndst, H)
        s = jnp.where(s > 0, s, 0.2 * s)
        mask = (adj[m] > 0)[:, :, None]
        s = jnp.where(mask, s, -1e30)
        mx = s.max(axis=0, keepdims=True)
        p = jnp.where(mask, jnp.exp(s - mx), 0.0)
        alpha = p / p.sum(axis=0, keepdims=True)
        hp = jnp.einsum('ijh,ihd->jhd', alpha, Wh_hd)            # (N, H, D)
        hp = hp + params["bias"][m].reshape(1, H, D)
        hp = jnp.where(hp > 0, hp, jnp.exp(jnp.minimum(hp, 0.0)) - 1.0)
        embs.append(hp.reshape(N, H * D))
    z = jnp.stack(embs, axis=1)                                  # (N, M, F)
    w = jnp.tanh(z @ params["W1"] + params["b1"]) @ params["W2"] # (N, M, 1)
    w = w.mean(0)                                                # (M, 1)
    beta = jax.nn.softmax(w, axis=0)                             # (M, 1)
    return (beta[None] * z).sum(1)                               # (N, F)


# ----------------------------------------------------------------------------
if __name__ == "__main__":
    # Sizes: num_meta_paths=2, N=64 nodes, in_size=32, out_size=8, heads=4
    M, N, F_IN, D, H = 2, 64, 32, 8, 4
    HD = H * D
    HIDDEN = 128   # SemanticAttention default hidden_size

    key = jax.random.PRNGKey(0)
    ks = jax.random.split(key, 10)
    gain = math.sqrt(2.0)

    # Node features
    h = jax.random.normal(ks[0], (N, F_IN), dtype=jnp.float32)

    # Dense 0/1 adjacency per meta-path, with self-loops (edge i->j at [m,i,j])
    adj = (jax.random.uniform(ks[1], (M, N, N)) < 0.3).astype(jnp.float32)
    adj = jnp.maximum(adj, jnp.eye(N, dtype=jnp.float32)[None])

    # Per-meta-path GATConv parameters (xavier-normal style, deterministic)
    std_w = gain * math.sqrt(2.0 / (F_IN + HD))
    std_a = gain * math.sqrt(2.0 / (H * D + D))
    params = {
        "W": std_w * jax.random.normal(ks[2], (M, F_IN, HD), dtype=jnp.float32),
        "attn_l": std_a * jax.random.normal(ks[3], (M, 1, HD), dtype=jnp.float32),
        "attn_r": std_a * jax.random.normal(ks[4], (M, 1, HD), dtype=jnp.float32),
        "bias": jnp.zeros((M, 1, HD), dtype=jnp.float32),   # init.constant_(bias, 0)
        # SemanticAttention: Linear(HD, HIDDEN) + tanh + Linear(HIDDEN, 1, bias=False)
        "W1": (1.0 / math.sqrt(HD)) * jax.random.normal(ks[5], (HD, HIDDEN), dtype=jnp.float32),
        "b1": (1.0 / math.sqrt(HD)) * jax.random.normal(ks[6], (1, HIDDEN), dtype=jnp.float32),
        "W2": (1.0 / math.sqrt(HIDDEN)) * jax.random.normal(ks[7], (HIDDEN, 1), dtype=jnp.float32),
    }

    out = han_layer(adj, h, params, num_heads=H, out_feats=D)
    out = jax.block_until_ready(out)

    ref = jax.block_until_ready(han_reference(adj, h, params, num_heads=H, out_feats=D))
    assert out.shape == (N, HD)
    # Tolerance accounts for bf16 MXU inputs, bf16 z round-trip and approx EUP
    # reciprocals (scores / softmax / exp are kept in f32 inside the kernel).
    np.testing.assert_allclose(np.asarray(out), np.asarray(ref), rtol=2e-2, atol=2e-2)

    print("KERNEL_OK")
</pallas_src>

<mosaic_0001>
module attributes {stable_mosaic.version = 11 : i64} {
  func.func @proj_kernel(%arg0: i32, %arg1: memref<128x32xbf16, #tpu.memory_space<vmem>>, %arg2: memref<1x32x128xbf16, #tpu.memory_space<vmem>>, %arg3: memref<1x128x8xf32, #tpu.memory_space<vmem>>, %arg4: memref<1x128x128xbf16, #tpu.memory_space<vmem>>, %arg5: memref<1x4x128xf32, #tpu.memory_space<vmem>>, %arg6: memref<1x128x4xf32, #tpu.memory_space<vmem>>) attributes {dimension_semantics = [#tpu.dimension_semantics<parallel>], iteration_bounds = array<i64: 2>, scalar_prefetch = 0 : i64, scratch_operands = 0 : i64, tpu.core_type = #tpu.core_type<tc>, window_params = [{pipeline_mode = #tpu.pipeline_mode<synchronous>, transform_indices = @transform_0, window_bounds = array<i64: 128, 32>}, {transform_indices = @transform_1, window_bounds = array<i64: 1, 32, 128>}, {transform_indices = @transform_2, window_bounds = array<i64: 1, 128, 8>}, {transform_indices = @transform_3, window_bounds = array<i64: 1, 128, 128>}, {transform_indices = @transform_4, window_bounds = array<i64: 1, 4, 128>}, {transform_indices = @transform_5, window_bounds = array<i64: 1, 128, 4>}]} {
    %c0 = arith.constant 0 : index
    %c0_0 = arith.constant 0 : index
    %0 = vector.load %arg1[%c0, %c0_0] : memref<128x32xbf16, #tpu.memory_space<vmem>>, vector<128x32xbf16>
    %c0_1 = arith.constant 0 : index
    %c0_2 = arith.constant 0 : index
    %c0_3 = arith.constant 0 : index
    %1 = vector.load %arg2[%c0_1, %c0_2, %c0_3] : memref<1x32x128xbf16, #tpu.memory_space<vmem>>, vector<1x32x128xbf16>
    %2 = vector.shape_cast %1 : vector<1x32x128xbf16> to vector<32x128xbf16>
    %cst = arith.constant dense<0.000000e+00> : vector<128x128xf32>
    %3 = tpu.matmul %0, %2, %cst {dimension_numbers = #tpu.dot_dimension_numbers<[1], [0], [0], [1], [0, 0, 1, 1], [], []>} : vector<128x32xbf16>, vector<32x128xbf16>, vector<128x128xf32> -> vector<128x128xf32>
    %c0_4 = arith.constant 0 : index
    %c0_5 = arith.constant 0 : index
    %c0_6 = arith.constant 0 : index
    %4 = vector.load %arg3[%c0_4, %c0_5, %c0_6] : memref<1x128x8xf32, #tpu.memory_space<vmem>>, vector<1x128x8xf32>
    %5 = vector.shape_cast %4 : vector<1x128x8xf32> to vector<128x8xf32>
    %cst_7 = arith.constant dense<0.000000e+00> : vector<128x8xf32>
    %6 = tpu.matmul %3, %5, %cst_7 {dimension_numbers = #tpu.dot_dimension_numbers<[1], [0], [0], [1], [0, 0, 1, 1], [], []>} : vector<128x128xf32>, vector<128x8xf32>, vector<128x8xf32> -> vector<128x8xf32>
    %7 = arith.truncf %3 : vector<128x128xf32> to vector<128x128xbf16>
    %c0_8 = arith.constant 0 : index
    %c0_9 = arith.constant 0 : index
    %c0_10 = arith.constant 0 : index
    %8 = vector.load %arg4[%c0_8, %c0_9, %c0_10] : memref<1x128x128xbf16, #tpu.memory_space<vmem>>, vector<1x128x128xbf16>
    %9 = vector.shape_cast %8 : vector<1x128x128xbf16> to vector<128x128xbf16>
    %10 = vector.shape_cast %7 : vector<128x128xbf16> to vector<1x128x128xbf16>
    tpu.vector_store %arg4[%c0_8, %c0_9, %c0_10], %10 {strides = array<i32>} : memref<1x128x128xbf16, #tpu.memory_space<vmem>>, vector<1x128x128xbf16>,
    %11 = tpu.transpose %6, [1, 0] : vector<128x8xf32> -> vector<8x128xf32>
    %12 = vector.extract_strided_slice %11 {offsets = [0, 0], sizes = [4, 128], strides = [1, 1]} : vector<8x128xf32> to vector<4x128xf32>
    %c0_11 = arith.constant 0 : index
    %c0_12 = arith.constant 0 : index
    %c0_13 = arith.constant 0 : index
    %13 = vector.load %arg5[%c0_11, %c0_12, %c0_13] : memref<1x4x128xf32, #tpu.memory_space<vmem>>, vector<1x4x128xf32>
    %14 = vector.shape_cast %13 : vector<1x4x128xf32> to vector<4x128xf32>
    %15 = vector.shape_cast %12 : vector<4x128xf32> to vector<1x4x128xf32>
    tpu.vector_store %arg5[%c0_11, %c0_12, %c0_13], %15 {strides = array<i32>} : memref<1x4x128xf32, #tpu.memory_space<vmem>>, vector<1x4x128xf32>,
    %16 = vector.extract_strided_slice %6 {offsets = [0, 4], sizes = [128, 4], strides = [1, 1]} : vector<128x8xf32> to vector<128x4xf32>
    %c0_14 = arith.constant 0 : index
    %c0_15 = arith.constant 0 : index
    %c0_16 = arith.constant 0 : index
    %17 = vector.load %arg6[%c0_14, %c0_15, %c0_16] : memref<1x128x4xf32, #tpu.memory_space<vmem>>, vector<1x128x4xf32>
    %18 = vector.shape_cast %17 : vector<1x128x4xf32> to vector<128x4xf32>
    %19 = vector.shape_cast %16 : vector<128x4xf32> to vector<1x128x4xf32>
    tpu.vector_store %arg6[%c0_14, %c0_15, %c0_16], %19 {strides = array<i32>} : memref<1x128x4xf32, #tpu.memory_space<vmem>>, vector<1x128x4xf32>,
    return
  }
  func.func @transform_0(%arg0: i32) -> (i32, i32) {
    %c0_i32 = arith.constant 0 : i32
    %c0_i32_0 = arith.constant 0 : i32
    %c0_i32_1 = arith.constant 0 : i32
    return %c0_i32, %c0_i32_0 : i32, i32
  }
  func.func @transform_1(%arg0: i32) -> (i32, i32, i32) {
    %c0_i32 = arith.constant 0 : i32
    %c0_i32_0 = arith.constant 0 : i32
    %c0_i32_1 = arith.constant 0 : i32
    return %arg0, %c0_i32, %c0_i32_0 : i32, i32, i32
  }
  func.func @transform_2(%arg0: i32) -> (i32, i32, i32) {
    %c0_i32 = arith.constant 0 : i32
    %c0_i32_0 = arith.constant 0 : i32
    %c0_i32_1 = arith.constant 0 : i32
    return %arg0, %c0_i32, %c0_i32_0 : i32, i32, i32
  }
  func.func @transform_3(%arg0: i32) -> (i32, i32, i32) {
    %c0_i32 = arith.constant 0 : i32
    %c0_i32_0 = arith.constant 0 : i32
    %c0_i32_1 = arith.constant 0 : i32
    return %arg0, %c0_i32, %c0_i32_0 : i32, i32, i32
  }
  func.func @transform_4(%arg0: i32) -> (i32, i32, i32) {
    %c0_i32 = arith.constant 0 : i32
    %c0_i32_0 = arith.constant 0 : i32
    %c0_i32_1 = arith.constant 0 : i32
    return %arg0, %c0_i32, %c0_i32_0 : i32, i32, i32
  }
  func.func @transform_5(%arg0: i32) -> (i32, i32, i32) {
    %c0_i32 = arith.constant 0 : i32
    %c0_i32_0 = arith.constant 0 : i32
    %c0_i32_1 = arith.constant 0 : i32
    return %arg0, %c0_i32, %c0_i32_0 : i32, i32, i32
  }
}

</mosaic_0001>

<llo_original>
// kernel: tpu_custom_call.1
$region0: #{tpu_custom_call.1}
  #allocation0 [shape = 'u32[]', space=smem, size = 0x4, offset = 0x4, fixed_abs, tag = 'smem constant byte address 0x4 - core index']
  #allocation1 [shape = 'u32[144,128]{1,0:T(1,128)}', space=vmem, size = 0x12000, scoped, tag = 'internal scratch']
  %s0 = inlined_call_operand.vmem [shape: bf16[128,32], index: 0, kind: input, shape index: {}]
  %s1 = inlined_call_operand.vmem [shape: bf16[2,32,128], index: 1, kind: input, shape index: {}]
  %s2 = inlined_call_operand.vmem [shape: f32[2,128,8], index: 2, kind: input, shape index: {}]
  %s3 = inlined_call_operand.hbm [shape: bf16[2,128,128], index: 3, kind: output, shape index: {0}]
  %s4 = inlined_call_operand.hbm [shape: f32[2,4,128], index: 4, kind: output, shape index: {1}]
  %s5 = inlined_call_operand.vmem [shape: f32[2,128,4], index: 5, kind: output, shape index: {2}]
  %6 = xla_tuple %s3, %s4, %s5
  %s7 = sld [smem:[#allocation0]]
  $region61: #{tpu_custom_call.1} parent=0
    _
  %s9 = ssub.s32 1, %s7
  %s10 = scalar_select 0, %s9, %s7
  $region1: #{tpu_custom_call.1} parent=0
    #allocation2 [shape = 'u8[65536]{0}', space=vmem, size = 0x10000, scoped, tag = 'output window, operand 0']
    #allocation3 [shape = 's32[2]{0}', space=sflag, size = 0x8, scoped, tag = 'scoped memory for tpu_custom_call.1']
    #allocation4 [shape = 'u8[4096]{0}', space=vmem, size = 0x1000, scoped, tag = 'output window, operand 1']
    #allocation5 [shape = 's32[2]{0}', space=sflag, size = 0x8, scoped, tag = 'scoped memory for tpu_custom_call.1']
    %11 = vsyncpa [#allocation3], 0
    %s12 = scalar_lea.sflag [#allocation3], 1
    %13 = vsyncpa %s12, 0
    %14 = vsyncpa [#allocation5], 0
    %s15 = scalar_lea.sflag [#allocation5], 1
    %16 = vsyncpa %s15, 0
    loop: start=0, step=1, limit=4
    $region2: #{tpu_custom_call.1} parent=1 // loop_pre_header
      _
    $region3: #{tpu_custom_call.1} parent=1 // loop_header
      %s18 = sphi 0, %s22
      %p19 = scmp.ge.s32.totalorder %s18, 4
      %s26 = sphi 0, %s26
      %s28 = sphi 0, %s26
      %s29 = sphi 0, %s28
      %s43 = sphi 0, %s29
      %s49 = sphi 0, %s51
      %s52 = sphi 0, %s49
      %s53 = sphi 0, %s52
      %s69 = sphi 0, %s53
      %s75 = sphi 0, %s77
      %s78 = sphi 0, %s75
      %s79 = sphi 0, %s78
      %s95 = sphi 0, %s79
      %s101 = sphi 0, %s103
      %s104 = sphi 0, %s101
      %s105 = sphi 0, %s104
      %s121 = sphi 0, %s105
      %s127 = sphi 0, %s129
      %s130 = sphi 0, %s127
      %s131 = sphi 0, %s130
      %s147 = sphi 0, %s131
      %s153 = sphi 0, %s155
      %s156 = sphi 0, %s153
      %s157 = sphi 0, %s156
      %s173 = sphi 0, %s157
    $region4: #{tpu_custom_call.1} parent=1 // loop_header_branch
      %21 = sbr.rel (%p19) target = $region8
    $region5: #{tpu_custom_call.1} parent=1 // loop_body
      %s23 = ssub.s32 %s18, 1
      %s24 = ssub.s32 %s18, 2
      %s25 = sadd.s32 %s18, 1
      %s27 = sadd.s32 %s26, 1
      %p30 = scmp.eq.s32.totalorder %s18, 1
      %p31 = scmp.ne.s32.totalorder %s26, %s28
      %p32 = scmp.eq.s32.totalorder %s18, 0
      %p33 = por %p31, %p32
      %p34 = scmp.ne.s32.totalorder %s26, %s28
      %p35 = scmp.eq.s32.totalorder %s23, 1
      %p36 = por %p34, %p35
      %p37 = scmp.ne.s32.totalorder %s28, %s29
      %p38 = scmp.eq.s32.totalorder %s23, 0
      %p39 = por %p37, %p38
      %p40 = scmp.ne.s32.totalorder %s28, %s29
      %p41 = scmp.eq.s32.totalorder %s24, 1
      %p42 = por %p40, %p41
      %p44 = scmp.ne.s32.totalorder %s29, %s43
      %p45 = scmp.eq.s32.totalorder %s24, 0
      %p46 = por %p44, %p45
      %s47 = ssub.s32 %s18, %s25
      %p48 = scmp.eq.s32.totalorder %s47, 0
      %s50 = sadd.s32 %s49, 1
      %s51 = scalar_select %p48, %s49, %s50
      %p54 = pneg %p48
      %p55 = scmp.eq.s32.totalorder %s18, 1
      %p56 = por %p54, %p55
      %p57 = scmp.ne.s32.totalorder %s49, %s52
      %p58 = scmp.eq.s32.totalorder %s18, 0
      %p59 = por %p57, %p58
      %p60 = scmp.ne.s32.totalorder %s49, %s52
      %p61 = scmp.eq.s32.totalorder %s23, 1
      %p62 = por %p60, %p61
      %p63 = scmp.ne.s32.totalorder %s52, %s53
      %p64 = scmp.eq.s32.totalorder %s23, 0
      %p65 = por %p63, %p64
      %p66 = scmp.ne.s32.totalorder %s52, %s53
      %p67 = scmp.eq.s32.totalorder %s24, 1
      %p68 = por %p66, %p67
      %p70 = scmp.ne.s32.totalorder %s53, %s69
      %p71 = scmp.eq.s32.totalorder %s24, 0
      %p72 = por %p70, %p71
      %s73 = ssub.s32 %s18, %s25
      %p74 = scmp.eq.s32.totalorder %s73, 0
      %s76 = sadd.s32 %s75, 1
      %s77 = scalar_select %p74, %s75, %s76
      %p80 = pneg %p74
      %p81 = scmp.eq.s32.totalorder %s18, 1
      %p82 = por %p80, %p81
      %p83 = scmp.ne.s32.totalorder %s75, %s78
      %p84 = scmp.eq.s32.totalorder %s18, 0
      %p85 = por %p83, %p84
      %p86 = scmp.ne.s32.totalorder %s75, %s78
      %p87 = scmp.eq.s32.totalorder %s23, 1
      %p88 = por %p86, %p87
      %p89 = scmp.ne.s32.totalorder %s78, %s79
      %p90 = scmp.eq.s32.totalorder %s23, 0
      %p91 = por %p89, %p90
      %p92 = scmp.ne.s32.totalorder %s78, %s79
      %p93 = scmp.eq.s32.totalorder %s24, 1
      %p94 = por %p92, %p93
      %p96 = scmp.ne.s32.totalorder %s79, %s95
      %p97 = scmp.eq.s32.totalorder %s24, 0
      %p98 = por %p96, %p97
      %s99 = ssub.s32 %s18, %s25
      %p100 = scmp.eq.s32.totalorder %s99, 0
      %s102 = sadd.s32 %s101, 1
      %s103 = scalar_select %p100, %s101, %s102
      %p106 = pneg %p100
      %p107 = scmp.eq.s32.totalorder %s18, 1
      %p108 = por %p106, %p107
      %p109 = scmp.ne.s32.totalorder %s101, %s104
      %p110 = scmp.eq.s32.totalorder %s18, 0
      %p111 = por %p109, %p110
      %p112 = scmp.ne.s32.totalorder %s101, %s104
      %p113 = scmp.eq.s32.totalorder %s23, 1
      %p114 = por %p112, %p113
      %p115 = scmp.ne.s32.totalorder %s104, %s105
      %p116 = scmp.eq.s32.totalorder %s23, 0
      %p117 = por %p115, %p116
      %p118 = scmp.ne.s32.totalorder %s104, %s105
      %p119 = scmp.eq.s32.totalorder %s24, 1
      %p120 = por %p118, %p119
      %p122 = scmp.ne.s32.totalorder %s105, %s121
      %p123 = scmp.eq.s32.totalorder %s24, 0
      %p124 = por %p122, %p123
      %s125 = ssub.s32 %s18, %s25
      %p126 = scmp.eq.s32.totalorder %s125, 0
      %s128 = sadd.s32 %s127, 1
      %s129 = scalar_select %p126, %s127, %s128
      %p132 = pneg %p126
      %p133 = scmp.eq.s32.totalorder %s18, 1
      %p134 = por %p132, %p133
      %p135 = scmp.ne.s32.totalorder %s127, %s130
      %p136 = scmp.eq.s32.totalorder %s18, 0
      %p137 = por %p135, %p136
      %p138 = scmp.ne.s32.totalorder %s127, %s130
      %p139 = scmp.eq.s32.totalorder %s23, 1
      %p140 = por %p138, %p139
      %p141 = scmp.ne.s32.totalorder %s130, %s131
      %p142 = scmp.eq.s32.totalorder %s23, 0
      %p143 = por %p141, %p142
      %p144 = scmp.ne.s32.totalorder %s130, %s131
      %p145 = scmp.eq.s32.totalorder %s24, 1
      %p146 = por %p144, %p145
      %p148 = scmp.ne.s32.totalorder %s131, %s147
      %p149 = scmp.eq.s32.totalorder %s24, 0
      %p150 = por %p148, %p149
      %s151 = ssub.s32 %s18, %s25
      %p152 = scmp.eq.s32.totalorder %s151, 0
      %s154 = sadd.s32 %s153, 1
      %s155 = scalar_select %p152, %s153, %s154
      %p158 = pneg %p152
      %p159 = scmp.eq.s32.totalorder %s18, 1
      %p160 = por %p158, %p159
      %p161 = scmp.ne.s32.totalorder %s153, %s156
      %p162 = scmp.eq.s32.totalorder %s18, 0
      %p163 = por %p161, %p162
      %p164 = scmp.ne.s32.totalorder %s153, %s156
      %p165 = scmp.eq.s32.totalorder %s23, 1
      %p166 = por %p164, %p165
      %p167 = scmp.ne.s32.totalorder %s156, %s157
      %p168 = scmp.eq.s32.totalorder %s23, 0
      %p169 = por %p167, %p168
      %p170 = scmp.ne.s32.totalorder %s156, %s157
      %p171 = scmp.eq.s32.totalorder %s24, 1
      %p172 = por %p170, %p171
      %p174 = scmp.ne.s32.totalorder %s157, %s173
      %p175 = scmp.eq.s32.totalorder %s24, 0
      %p176 = por %p174, %p175
      %p177 = scmp.le.s32.totalorder 1, %s18
      %p178 = scmp.lt.s32.totalorder %s18, 3
      %p179 = pnand %p177, %p178
      %p180 = pneg %p179
      // Predicated region
      $region9: #{tpu_custom_call.1} parent=5 // pred_check
        _
      $region10: #{tpu_custom_call.1} parent=5 // pred_check_branch
        %182 = sbr.rel (%p179) target = $region12
      $region11: #{tpu_custom_call.1} parent=5 // pred_region
        %s183 = ssub.s32 %s18, 1
        // Predicated region
        $region13: #{tpu_custom_call.1} parent=11 // pred_check
          %p184 = pneg %p39
        $region14: #{tpu_custom_call.1} parent=11 // pred_check_branch
          %186 = sbr.rel (%p184) target = $region16
        $region15: #{tpu_custom_call.1} parent=11 // pred_region
          _
        $region16: #{tpu_custom_call.1} parent=11 // pred_fallthru
          _
      $region12: #{tpu_custom_call.1} parent=5 // pred_fallthru
        _
      %p187 = scmp.lt.s32.totalorder %s18, 2
      // Predicated region
      $region17: #{tpu_custom_call.1} parent=5 // pred_check
        %p188 = pneg %p187
      $region18: #{tpu_custom_call.1} parent=5 // pred_check_branch
        %190 = sbr.rel (%p188) target = $region20
      $region19: #{tpu_custom_call.1} parent=5 // pred_region
        // Predicated region
        $region21: #{tpu_custom_call.1} parent=19 // pred_check
          %p191 = pneg %p59
        $region22: #{tpu_custom_call.1} parent=19 // pred_check_branch
          %193 = sbr.rel (%p191) target = $region24
        $region23: #{tpu_custom_call.1} parent=19 // pred_region
          %p194 = scmp.lt.s32.totalorder %s18, 1
          %s195 = scalar_select %p194, %s18, 1
          %s196 = smul.addr %s195, 4
          %s197 = smul.addr %s196, 4
          %s198 = scalar_lea.vmem %s1, %s197
        $region24: #{tpu_custom_call.1} parent=19 // pred_fallthru
          _
        // Predicated region
        $region25: #{tpu_custom_call.1} parent=19 // pred_check
          %p199 = pneg %p85
        $region26: #{tpu_custom_call.1} parent=19 // pred_check_branch
          %201 = sbr.rel (%p199) target = $region28
        $region27: #{tpu_custom_call.1} parent=19 // pred_region
          %p202 = scmp.lt.s32.totalorder %s18, 1
          %s203 = scalar_select %p202, %s18, 1
          %s204 = smul.addr %s203, 16
          %s205 = smul.addr %s204, 8
          %s206 = scalar_lea.vmem %s2, %s205
        $region28: #{tpu_custom_call.1} parent=19 // pred_fallthru
          _
      $region20: #{tpu_custom_call.1} parent=5 // pred_fallthru
        _
      %p207 = scmp.le.s32.totalorder 1, %s18
      %p208 = scmp.lt.s32.totalorder %s18, 3
      %p209 = pnand %p207, %p208
      %p210 = pneg %p209
      // Predicated region
      $region29: #{tpu_custom_call.1} parent=5 // pred_check
        _
      $region30: #{tpu_custom_call.1} parent=5 // pred_check_branch
        %212 = sbr.rel (%p209) target = $region32
      $region31: #{tpu_custom_call.1} parent=5 // pred_region
        %s213 = ssub.s32 %s18, 1
        %p214 = pneg %p39
        %p215 = pneg %p36
        %p216 = scmp.lt.s32.totalorder %s23, 1
        %s217 = scalar_select %p216, %s23, 1
        %s218 = smul.addr %s217, 4
        %s219 = smul.addr %s218, 4
        %s220 = scalar_lea.vmem %s1, %s219
        %p221 = pneg %p65
        %p222 = pneg %p62
        %p223 = scmp.lt.s32.totalorder %s23, 1
        %s224 = scalar_select %p223, %s23, 1
        %s225 = smul.addr %s224, 16
        %s226 = smul.addr %s225, 8
        %s227 = scalar_lea.vmem %s2, %s226
        %p228 = pneg %p91
        %p229 = pneg %p88
        %p230 = pneg %p117
        %p231 = pneg %p114
        %s232 = sand.u32 %s104, 1
        %s233 = scalar_lea.sflag [#allocation3], %s232
        %s234 = sand.u32 %s104, 1
        %s235 = smul.addr %s234, 64
        %s236 = scalar_lea.vmem [#allocation2], %s235
        %p237 = pneg %p143
        %p238 = pneg %p140
        %s239 = sand.u32 %s130, 1
        %s240 = scalar_lea.sflag [#allocation5], %s239
        %s241 = sand.u32 %s130, 1
        %s242 = smul.addr %s241, 4
        %s243 = scalar_lea.vmem [#allocation4], %s242
        %p244 = pneg %p169
        %p245 = pneg %p166
        %p246 = scmp.lt.s32.totalorder %s23, 1
        %s247 = scalar_select %p246, %s23, 1
        %s248 = smul.addr %s247, 16
        %s249 = smul.addr %s248, 8
        %s250 = scalar_lea.vmem %s5, %s249
        %p251 = scmp.lt.s32.totalorder %s23, 1
        %s252 = scalar_select %p251, %s23, 1
        %s253 = smul.addr %s252, 4
        %s254 = smul.addr %s253, 4
        %s255 = scalar_lea.vmem %s1, %s254
        %p256 = scmp.lt.s32.totalorder %s23, 1
        %s257 = scalar_select %p256, %s23, 1
        %s258 = smul.addr %s257, 16
        %s259 = smul.addr %s258, 8
        %s260 = scalar_lea.vmem %s2, %s259
        %p261 = scmp.lt.s32.totalorder %s23, 1
        %s262 = scalar_select %p261, %s23, 1
        %s263 = smul.addr %s262, 16
        %s264 = smul.addr %s263, 8
        %s265 = scalar_lea.vmem %s5, %s264
        %v267 = vld [vmem:[%s0] sm:$0xf]
        %v268 = vld [vmem:[%s0 + $0x4] sm:$0xf]
        %v269 = vld [vmem:[%s0 + $0x8] sm:$0xf]
        %v270 = vld [vmem:[%s0 + $0xc] sm:$0xf]
        %v271 = vld [vmem:[%s0 + $0x10] sm:$0xf]
        %v272 = vld [vmem:[%s0 + $0x14] sm:$0xf]
        %v273 = vld [vmem:[%s0 + $0x18] sm:$0xf]
        %v274 = vld [vmem:[%s0 + $0x1c] sm:$0xf]
        %v275 = vld [vmem:[%s0 + $0x20] sm:$0xf]
        %v276 = vld [vmem:[%s0 + $0x24] sm:$0xf]
        %v277 = vld [vmem:[%s0 + $0x28] sm:$0xf]
        %v278 = vld [vmem:[%s0 + $0x2c] sm:$0xf]
        %v279 = vld [vmem:[%s0 + $0x30] sm:$0xf]
        %v280 = vld [vmem:[%s0 + $0x34] sm:$0xf]
        %v281 = vld [vmem:[%s0 + $0x38] sm:$0xf]
        %v282 = vld [vmem:[%s0 + $0x3c] sm:$0xf]
        %v283 = vld [vmem:[%s255] sm:$0xf]
        %v284 = vld [vmem:[%s255 + $0x4] sm:$0xf]
        %v285 = vld [vmem:[%s255 + $0x8] sm:$0xf]
        %v286 = vld [vmem:[%s255 + $0xc] sm:$0xf]
        %v303 = vunpack.c.l.b16 %v267
        %v304 = vunpack.c.l.b16 %v268
        %v305 = vunpack.c.l.b16 %v269
        %v306 = vunpack.c.l.b16 %v270
        %v307 = vunpack.c.l.b16 %v271
        %v308 = vunpack.c.l.b16 %v272
        %v309 = vunpack.c.l.b16 %v273
        %v310 = vunpack.c.l.b16 %v274
        %v311 = vunpack.c.l.b16 %v275
        %v312 = vunpack.c.l.b16 %v276
        %v313 = vunpack.c.l.b16 %v277
        %v314 = vunpack.c.l.b16 %v278
        %v315 = vunpack.c.l.b16 %v279
        %v316 = vunpack.c.l.b16 %v280
        %v317 = vunpack.c.l.b16 %v281
        %v318 = vunpack.c.l.b16 %v282
        %v319 = vpack.c.b16 %v304, %v303
        %v320 = vpack.c.b16 %v306, %v305
        %v321 = vpack.c.b16 %v308, %v307
        %v322 = vpack.c.b16 %v310, %v309
        %v323 = vpack.c.b16 %v312, %v311
        %v324 = vpack.c.b16 %v314, %v313
        %v325 = vpack.c.b16 %v316, %v315
        %v326 = vpack.c.b16 %v318, %v317
        %v331 = vunpack.c.l.b16 %v283
        %v332 = vunpack.c.l.b16 %v284
        %v333 = vunpack.c.l.b16 %v285
        %v334 = vunpack.c.l.b16 %v286
        %v335 = vpack.c.b16 %v332, %v331
        %v336 = vpack.c.b16 %v334, %v333
        %vm339 = vcmask 261120
        %v341 = vsel %vm339, %v319, 0
        %v344 = vsel %vm339, %v320, 0
        %v347 = vsel %vm339, %v321, 0
        %v350 = vsel %vm339, %v322, 0
        %v353 = vsel %vm339, %v323, 0
        %v356 = vsel %vm339, %v324, 0
        %v359 = vsel %vm339, %v325, 0
        %v362 = vsel %vm339, %v326, 0
        %364 = vmatprep.subr.bf16.mxu0 0
        %365 = vmatpush1.bf16.msra.mxu0 %v335
        %366 = vmatprep.subr.bf16.mxu0 0
        %367 = vmatpush1.bf16.msra.mxu0 %v336
        %368 = vmatprep.subr.bf16.mxu0 0
        %369 = vmatpush1.bf16.msra.mxu0 0
        %370 = vmatprep.subr.bf16.mxu0 0
        %371 = vmatpush1.bf16.msra.mxu0 0
        %372 = vmatprep.subr.bf16.mxu0 0
        %373 = vmatpush1.bf16.msra.mxu0 0
        %374 = vmatprep.subr.bf16.mxu0 0
        %375 = vmatpush1.bf16.msra.mxu0 0
        %376 = vmatprep.subr.bf16.mxu0 0
        %377 = vmatpush1.bf16.msra.mxu0 0
        %378 = vmatprep.subr.bf16.mxu0 0
        %379 = vmatpush1.bf16.msra.mxu0 0
        %380 = vmatprep.subr.bf16.mxu0 0
        %381 = vmatpush1.bf16.msra.mxu0 0
        %382 = vmatprep.subr.bf16.mxu0 0
        %383 = vmatpush1.bf16.msra.mxu0 0
        %384 = vmatprep.subr.bf16.mxu0 0
        %385 = vmatpush1.bf16.msra.mxu0 0
        %386 = vmatprep.subr.bf16.mxu0 0
        %387 = vmatpush1.bf16.msra.mxu0 0
        %388 = vmatprep.subr.bf16.mxu0 0
        %389 = vmatpush1.bf16.msra.mxu0 0
        %390 = vmatprep.subr.bf16.mxu0 0
        %391 = vmatpush1.bf16.msra.mxu0 0
        %392 = vmatprep.subr.bf16.mxu0 0
        %393 = vmatpush1.bf16.msra.mxu0 0
        %394 = vmatprep.subr.bf16.mxu0 0
        %395 = vmatpush1.bf16.msra.mxu0 0
        %396 = vmatprep.mubr.bf16.mxu0 0
        %397 = vmatmul.mubr.bf16.gmra.mrb[0].mxu0 %v341
        %v398 = vpop.f32.mrb[0].mxu0
        %v399 = vadd.f32 0.0, %v398
        %v400 = vpop.f32.mrb[0].mxu0
        %v401 = vpop.f32.mrb[0].mxu0
        %v402 = vadd.f32 0.0, %v401
        %v403 = vpop.f32.mrb[0].mxu0
        %404 = vmatprep.mubr.bf16.mxu0 0
        %405 = vmatmul.mubr.bf16.gmra.mrb[0].mxu0 %v344
        %v406 = vpop.f32.mrb[0].mxu0
        %v407 = vadd.f32 0.0, %v406
        %v408 = vpop.f32.mrb[0].mxu0
        %v409 = vpop.f32.mrb[0].mxu0
        %v410 = vadd.f32 0.0, %v409
        %v411 = vpop.f32.mrb[0].mxu0
        %412 = vmatprep.mubr.bf16.mxu0 0
        %413 = vmatmul.mubr.bf16.gmra.mrb[0].mxu0 %v347
        %v414 = vpop.f32.mrb[0].mxu0
        %v415 = vadd.f32 0.0, %v414
        %v416 = vpop.f32.mrb[0].mxu0
        %v417 = vpop.f32.mrb[0].mxu0
        %v418 = vadd.f32 0.0, %v417
        %v419 = vpop.f32.mrb[0].mxu0
        %420 = vmatprep.mubr.bf16.mxu0 0
        %421 = vmatmul.mubr.bf16.gmra.mrb[0].mxu0 %v350
        %v422 = vpop.f32.mrb[0].mxu0
        %v423 = vadd.f32 0.0, %v422
        %v424 = vpop.f32.mrb[0].mxu0
        %v425 = vpop.f32.mrb[0].mxu0
        %v426 = vadd.f32 0.0, %v425
        %v427 = vpop.f32.mrb[0].mxu0
        %428 = vmatprep.mubr.bf16.mxu0 0
        %429 = vmatmul.mubr.bf16.gmra.mrb[0].mxu0 %v353
        %v430 = vpop.f32.mrb[0].mxu0
        %v431 = vadd.f32 0.0, %v430
        %v432 = vpop.f32.mrb[0].mxu0
        %v433 = vpop.f32.mrb[0].mxu0
        %v434 = vadd.f32 0.0, %v433
        %v435 = vpop.f32.mrb[0].mxu0
        %436 = vmatprep.mubr.bf16.mxu0 0
        %437 = vmatmul.mubr.bf16.gmra.mrb[0].mxu0 %v356
        %v438 = vpop.f32.mrb[0].mxu0
        %v439 = vadd.f32 0.0, %v438
        %v440 = vpop.f32.mrb[0].mxu0
        %v441 = vpop.f32.mrb[0].mxu0
        %v442 = vadd.f32 0.0, %v441
        %v443 = vpop.f32.mrb[0].mxu0
        %444 = vmatprep.mubr.bf16.mxu0 0
        %445 = vmatmul.mubr.bf16.gmra.mrb[0].mxu0 %v359
        %v446 = vpop.f32.mrb[0].mxu0
        %v447 = vadd.f32 0.0, %v446
        %v448 = vpop.f32.mrb[0].mxu0
        %v449 = vpop.f32.mrb[0].mxu0
        %v450 = vadd.f32 0.0, %v449
        %v451 = vpop.f32.mrb[0].mxu0
        %452 = vmatprep.mubr.bf16.mxu0 0
        %453 = vmatmul.mubr.bf16.gmra.mrb[0].mxu0 %v362
        %v454 = vpop.f32.mrb[0].mxu0
        %v455 = vadd.f32 0.0, %v454
        %v456 = vpop.f32.mrb[0].mxu0
        %v457 = vpop.f32.mrb[0].mxu0
        %v458 = vadd.f32 0.0, %v457
        %v459 = vpop.f32.mrb[0].mxu0
        %460 = vdwg.mxu0
        %v461 = vld [vmem:[%s260] sm:$0xff]
        %v462 = vld [vmem:[%s260 + $0x8] sm:$0xff]
        %v463 = vld [vmem:[%s260 + $0x10] sm:$0xff]
        %v464 = vld [vmem:[%s260 + $0x18] sm:$0xff]
        %v465 = vld [vmem:[%s260 + $0x20] sm:$0xff]
        %v466 = vld [vmem:[%s260 + $0x28] sm:$0xff]
        %v467 = vld [vmem:[%s260 + $0x30] sm:$0xff]
        %v468 = vld [vmem:[%s260 + $0x38] sm:$0xff]
        %v469 = vld [vmem:[%s260 + $0x40] sm:$0xff]
        %v470 = vld [vmem:[%s260 + $0x48] sm:$0xff]
        %v471 = vld [vmem:[%s260 + $0x50] sm:$0xff]
        %v472 = vld [vmem:[%s260 + $0x58] sm:$0xff]
        %v473 = vld [vmem:[%s260 + $0x60] sm:$0xff]
        %v474 = vld [vmem:[%s260 + $0x68] sm:$0xff]
        %v475 = vld [vmem:[%s260 + $0x70] sm:$0xff]
        %v476 = vld [vmem:[%s260 + $0x78] sm:$0xff]
        %477 = vmatprep.subr.mxu0 0.0
        %478 = vmatpush1.msra.mxu0 %v461
        %479 = vmatprep.subr.mxu0 0.0
        %480 = vmatpush1.msra.mxu0 %v462
        %481 = vmatprep.subr.mxu0 0.0
        %482 = vmatpush1.msra.mxu0 %v463
        %483 = vmatprep.subr.mxu0 0.0
        %484 = vmatpush1.msra.mxu0 %v464
        %485 = vmatprep.subr.mxu0 0.0
        %486 = vmatpush1.msra.mxu0 %v465
        %487 = vmatprep.subr.mxu0 0.0
        %488 = vmatpush1.msra.mxu0 %v466
        %489 = vmatprep.subr.mxu0 0.0
        %490 = vmatpush1.msra.mxu0 %v467
        %491 = vmatprep.subr.mxu0 0.0
        %492 = vmatpush1.msra.mxu0 %v468
        %493 = vmatprep.subr.mxu0 0.0
        %494 = vmatpush1.msra.mxu0 %v469
        %495 = vmatprep.subr.mxu0 0.0
        %496 = vmatpush1.msra.mxu0 %v470
        %497 = vmatprep.subr.mxu0 0.0
        %498 = vmatpush1.msra.mxu0 %v471
        %499 = vmatprep.subr.mxu0 0.0
        %500 = vmatpush1.msra.mxu0 %v472
        %501 = vmatprep.subr.mxu0 0.0
        %502 = vmatpush1.msra.mxu0 %v473
        %503 = vmatprep.subr.mxu0 0.0
        %504 = vmatpush1.msra.mxu0 %v474
        %505 = vmatprep.subr.mxu0 0.0
        %506 = vmatpush1.msra.mxu0 %v475
        %507 = vmatprep.subr.mxu0 0.0
        %508 = vmatpush1.msra.mxu0 %v476
        %509 = vmatprep.subr.mxu0 0.0
        %510 = vmatpush1.msra.mxu0 0.0
        %511 = vmatprep.subr.mxu0 0.0
        %512 = vmatpush1.msra.mxu0 0.0
        %513 = vmatprep.subr.mxu0 0.0
        %514 = vmatpush1.msra.mxu0 0.0
        %515 = vmatprep.subr.mxu0 0.0
        %516 = vmatpush1.msra.mxu0 0.0
        %517 = vmatprep.subr.mxu0 0.0
        %518 = vmatpush1.msra.mxu0 0.0
        %519 = vmatprep.subr.mxu0 0.0
        %520 = vmatpush1.msra.mxu0 0.0
        %521 = vmatprep.subr.mxu0 0.0
        %522 = vmatpush1.msra.mxu0 0.0
        %523 = vmatprep.subr.mxu0 0.0
        %524 = vmatpush1.msra.mxu0 0.0
        %525 = vmatprep.subr.mxu0 0.0
        %526 = vmatpush1.msra.mxu0 0.0
        %527 = vmatprep.subr.mxu0 0.0
        %528 = vmatpush1.msra.mxu0 0.0
        %529 = vmatprep.subr.mxu0 0.0
        %530 = vmatpush1.msra.mxu0 0.0
        %531 = vmatprep.subr.mxu0 0.0
        %532 = vmatpush1.msra.mxu0 0.0
        %533 = vmatprep.subr.mxu0 0.0
        %534 = vmatpush1.msra.mxu0 0.0
        %535 = vmatprep.subr.mxu0 0.0
        %536 = vmatpush1.msra.mxu0 0.0
        %537 = vmatprep.subr.mxu0 0.0
        %538 = vmatpush1.msra.mxu0 0.0
        %539 = vmatprep.subr.mxu0 0.0
        %540 = vmatpush1.msra.mxu0 0.0
        %541 = vmatprep.mubr.f32.mxu0 0.0
        %542 = vmatmul.mubr.f32.gmra.mrb[0].mxu0 %v399
        %v543 = vpop.f32.mrb[0].mxu0
        %v544 = vadd.f32 0.0, %v543
        %v545 = vpop.f32.mrb[0].mxu0
        %546 = vmatprep.mubr.f32.mxu0 0.0
        %547 = vmatmul.mubr.f32.gmra.mrb[0].mxu0 %v402
        %v548 = vpop.f32.mrb[0].mxu0
        %v549 = vadd.f32 0.0, %v548
        %v550 = vpop.f32.mrb[0].mxu0
        %551 = vmatprep.mubr.f32.mxu0 0.0
        %552 = vmatmul.mubr.f32.gmra.mrb[0].mxu0 %v407
        %v553 = vpop.f32.mrb[0].mxu0
        %v554 = vadd.f32 0.0, %v553
        %v555 = vpop.f32.mrb[0].mxu0
        %556 = vmatprep.mubr.f32.mxu0 0.0
        %557 = vmatmul.mubr.f32.gmra.mrb[0].mxu0 %v410
        %v558 = vpop.f32.mrb[0].mxu0
        %v559 = vadd.f32 0.0, %v558
        %v560 = vpop.f32.mrb[0].mxu0
        %561 = vmatprep.mubr.f32.mxu0 0.0
        %562 = vmatmul.mubr.f32.gmra.mrb[0].mxu0 %v415
        %v563 = vpop.f32.mrb[0].mxu0
        %v564 = vadd.f32 0.0, %v563
        %v565 = vpop.f32.mrb[0].mxu0
        %566 = vmatprep.mubr.f32.mxu0 0.0
        %567 = vmatmul.mubr.f32.gmra.mrb[0].mxu0 %v418
        %v568 = vpop.f32.mrb[0].mxu0
        %v569 = vadd.f32 0.0, %v568
        %v570 = vpop.f32.mrb[0].mxu0
        %571 = vmatprep.mubr.f32.mxu0 0.0
        %572 = vmatmul.mubr.f32.gmra.mrb[0].mxu0 %v423
        %v573 = vpop.f32.mrb[0].mxu0
        %v574 = vadd.f32 0.0, %v573
        %v575 = vpop.f32.mrb[0].mxu0
        %576 = vmatprep.mubr.f32.mxu0 0.0
        %577 = vmatmul.mubr.f32.gmra.mrb[0].mxu0 %v426
        %v578 = vpop.f32.mrb[0].mxu0
        %v579 = vadd.f32 0.0, %v578
        %v580 = vpop.f32.mrb[0].mxu0
        %581 = vmatprep.mubr.f32.mxu0 0.0
        %582 = vmatmul.mubr.f32.gmra.mrb[0].mxu0 %v431
        %v583 = vpop.f32.mrb[0].mxu0
        %v584 = vadd.f32 0.0, %v583
        %v585 = vpop.f32.mrb[0].mxu0
        %586 = vmatprep.mubr.f32.mxu0 0.0
        %587 = vmatmul.mubr.f32.gmra.mrb[0].mxu0 %v434
        %v588 = vpop.f32.mrb[0].mxu0
        %v589 = vadd.f32 0.0, %v588
        %v590 = vpop.f32.mrb[0].mxu0
        %591 = vmatprep.mubr.f32.mxu0 0.0
        %592 = vmatmul.mubr.f32.gmra.mrb[0].mxu0 %v439
        %v593 = vpop.f32.mrb[0].mxu0
        %v594 = vadd.f32 0.0, %v593
        %v595 = vpop.f32.mrb[0].mxu0
        %596 = vmatprep.mubr.f32.mxu0 0.0
        %597 = vmatmul.mubr.f32.gmra.mrb[0].mxu0 %v442
        %v598 = vpop.f32.mrb[0].mxu0
        %v599 = vadd.f32 0.0, %v598
        %v600 = vpop.f32.mrb[0].mxu0
        %601 = vmatprep.mubr.f32.mxu0 0.0
        %602 = vmatmul.mubr.f32.gmra.mrb[0].mxu0 %v447
        %v603 = vpop.f32.mrb[0].mxu0
        %v604 = vadd.f32 0.0, %v603
        %v605 = vpop.f32.mrb[0].mxu0
        %606 = vmatprep.mubr.f32.mxu0 0.0
        %607 = vmatmul.mubr.f32.gmra.mrb[0].mxu0 %v450
        %v608 = vpop.f32.mrb[0].mxu0
        %v609 = vadd.f32 0.0, %v608
        %v610 = vpop.f32.mrb[0].mxu0
        %611 = vmatprep.mubr.f32.mxu0 0.0
        %612 = vmatmul.mubr.f32.gmra.mrb[0].mxu0 %v455
        %v613 = vpop.f32.mrb[0].mxu0
        %v614 = vadd.f32 0.0, %v613
        %v615 = vpop.f32.mrb[0].mxu0
        %616 = vmatprep.mubr.f32.mxu0 0.0
        %617 = vmatmul.mubr.f32.gmra.mrb[0].mxu0 %v458
        %v618 = vpop.f32.mrb[0].mxu0
        %v619 = vadd.f32 0.0, %v618
        %v620 = vpop.f32.mrb[0].mxu0
        %621 = vdwg.mxu0
        %v622 = vpack.c.bf16 %v402, %v399
        %v623 = vpack.c.bf16 %v410, %v407
        %v624 = vpack.c.bf16 %v418, %v415
        %v625 = vpack.c.bf16 %v426, %v423
        %v626 = vpack.c.bf16 %v434, %v431
        %v627 = vpack.c.bf16 %v442, %v439
        %v628 = vpack.c.bf16 %v450, %v447
        %v629 = vpack.c.bf16 %v458, %v455
        %v638 = vunpack.c.l.b16 %v622
        %v639 = vunpack.c.h.b16 %v622
        %v640 = vunpack.c.l.b16 %v623
        %v641 = vunpack.c.h.b16 %v623
        %v642 = vunpack.c.l.b16 %v624
        %v643 = vunpack.c.h.b16 %v624
        %v644 = vunpack.c.l.b16 %v625
        %v645 = vunpack.c.h.b16 %v625
        %v646 = vunpack.c.l.b16 %v626
        %v647 = vunpack.c.h.b16 %v626
        %v648 = vunpack.c.l.b16 %v627
        %v649 = vunpack.c.h.b16 %v627
        %v650 = vunpack.c.l.b16 %v628
        %v651 = vunpack.c.h.b16 %v628
        %v652 = vunpack.c.l.b16 %v629
        %v653 = vunpack.c.h.b16 %v629
        %v654 = vpack.c.b16 %v638, %v638
        %v655 = vpack.c.b16 %v639, %v639
        %v656 = vpack.c.b16 %v640, %v640
        %v657 = vpack.c.b16 %v641, %v641
        %v658 = vpack.c.b16 %v642, %v642
        %v659 = vpack.c.b16 %v643, %v643
        %v660 = vpack.c.b16 %v644, %v644
        %v661 = vpack.c.b16 %v645, %v645
        %v662 = vpack.c.b16 %v646, %v646
        %v663 = vpack.c.b16 %v647, %v647
        %v664 = vpack.c.b16 %v648, %v648
        %v665 = vpack.c.b16 %v649, %v649
        %v666 = vpack.c.b16 %v650, %v650
        %v667 = vpack.c.b16 %v651, %v651
        %v668 = vpack.c.b16 %v652, %v652
        %v669 = vpack.c.b16 %v653, %v653
        %686 = vst [vmem:[%s236] sm:$0xf] %v654
        %687 = vst [vmem:[%s236 + $0x4] sm:$0xf] %v655
        %688 = vst [vmem:[%s236 + $0x8] sm:$0xf] %v656
        %689 = vst [vmem:[%s236 + $0xc] sm:$0xf] %v657
        %690 = vst [vmem:[%s236 + $0x10] sm:$0xf] %v658
        %691 = vst [vmem:[%s236 + $0x14] sm:$0xf] %v659
        %692 = vst [vmem:[%s236 + $0x18] sm:$0xf] %v660
        %693 = vst [vmem:[%s236 + $0x1c] sm:$0xf] %v661
        %694 = vst [vmem:[%s236 + $0x20] sm:$0xf] %v662
        %695 = vst [vmem:[%s236 + $0x24] sm:$0xf] %v663
        %696 = vst [vmem:[%s236 + $0x28] sm:$0xf] %v664
        %697 = vst [vmem:[%s236 + $0x2c] sm:$0xf] %v665
        %698 = vst [vmem:[%s236 + $0x30] sm:$0xf] %v666
        %699 = vst [vmem:[%s236 + $0x34] sm:$0xf] %v667
        %700 = vst [vmem:[%s236 + $0x38] sm:$0xf] %v668
        %701 = vst [vmem:[%s236 + $0x3c] sm:$0xf] %v669
        %702 = vxpose.xlu0.b32.start [1/16] %v544, 128
        %703 = vxpose.xlu0.b32.cont [2/16] %v549, 128
        %704 = vxpose.xlu0.b32.cont [3/16] %v554, 128
        %705 = vxpose.xlu0.b32.cont [4/16] %v559, 128
        %706 = vxpose.xlu0.b32.cont [5/16] %v564, 128
        %707 = vxpose.xlu0.b32.cont [6/16] %v569, 128
        %708 = vxpose.xlu0.b32.cont [7/16] %v574, 128
        %709 = vxpose.xlu0.b32.cont [8/16] %v579, 128
        %710 = vxpose.xlu0.b32.cont [9/16] %v584, 128
        %711 = vxpose.xlu0.b32.cont [10/16] %v589, 128
        %712 = vxpose.xlu0.b32.cont [11/16] %v594, 128
        %713 = vxpose.xlu0.b32.cont [12/16] %v599, 128
        %714 = vxpose.xlu0.b32.cont [13/16] %v604, 128
        %715 = vxpose.xlu0.b32.cont [14/16] %v609, 128
        %716 = vxpose.xlu0.b32.cont [15/16] %v614, 128
        %717 = vxpose.xlu0.b32.end [16/16] %v619, 128
        %v718 = vpop.trf.xlu0
        %v719 = vpop.trf.xlu0
        %v720 = vpop.trf.xlu0
        %v721 = vpop.trf.xlu0
        %v722 = vpop.trf.xlu0
        %v723 = vpop.trf.xlu0
        %v724 = vpop.trf.xlu0
        %v725 = vpop.trf.xlu0
        %v726 = vpop.trf.xlu0
        %v727 = vpop.trf.xlu0
        %v728 = vpop.trf.xlu0
        %v729 = vpop.trf.xlu0
        %v730 = vpop.trf.xlu0
        %v731 = vpop.trf.xlu0
        %v732 = vpop.trf.xlu0
        %v733 = vpop.trf.xlu0
        %734 = vst [vmem:[%s243] sm:$0xf] %v718
        %751 = vrot.lane.b32.xlu0 %v544, 124
        %v752 = vpop.permute.xlu0 %751
        %753 = vrot.lane.b32.xlu0 %v549, 124
        %v754 = vpop.permute.xlu0 %753
        %755 = vrot.lane.b32.xlu0 %v554, 124
        %v756 = vpop.permute.xlu0 %755
        %757 = vrot.lane.b32.xlu0 %v559, 124
        %v758 = vpop.permute.xlu0 %757
        %759 = vrot.lane.b32.xlu0 %v564, 124
        %v760 = vpop.permute.xlu0 %759
        %761 = vrot.lane.b32.xlu0 %v569, 124
        %v762 = vpop.permute.xlu0 %761
        %763 = vrot.lane.b32.xlu0 %v574, 124
        %v764 = vpop.permute.xlu0 %763
        %765 = vrot.lane.b32.xlu0 %v579, 124
        %v766 = vpop.permute.xlu0 %765
        %767 = vrot.lane.b32.xlu0 %v584, 124
        %v768 = vpop.permute.xlu0 %767
        %769 = vrot.lane.b32.xlu0 %v589, 124
        %v770 = vpop.permute.xlu0 %769
        %771 = vrot.lane.b32.xlu0 %v594, 124
        %v772 = vpop.permute.xlu0 %771
        %773 = vrot.lane.b32.xlu0 %v599, 124
        %v774 = vpop.permute.xlu0 %773
        %775 = vrot.lane.b32.xlu0 %v604, 124
        %v776 = vpop.permute.xlu0 %775
        %777 = vrot.lane.b32.xlu0 %v609, 124
        %v778 = vpop.permute.xlu0 %777
        %779 = vrot.lane.b32.xlu0 %v614, 124
        %v780 = vpop.permute.xlu0 %779
        %781 = vrot.lane.b32.xlu0 %v619, 124
        %v782 = vpop.permute.xlu0 %781
        %vm799 = vcmask 31744
        %800 = vst.msk [vmem:[%s265] sm:$0xff] %vm799, %v752
        %801 = vst.msk [vmem:[%s265 + $0x8] sm:$0xff] %vm799, %v754
        %802 = vst.msk [vmem:[%s265 + $0x10] sm:$0xff] %vm799, %v756
        %803 = vst.msk [vmem:[%s265 + $0x18] sm:$0xff] %vm799, %v758
        %804 = vst.msk [vmem:[%s265 + $0x20] sm:$0xff] %vm799, %v760
        %805 = vst.msk [vmem:[%s265 + $0x28] sm:$0xff] %vm799, %v762
        %806 = vst.msk [vmem:[%s265 + $0x30] sm:$0xff] %vm799, %v764
        %807 = vst.msk [vmem:[%s265 + $0x38] sm:$0xff] %vm799, %v766
        %808 = vst.msk [vmem:[%s265 + $0x40] sm:$0xff] %vm799, %v768
        %809 = vst.msk [vmem:[%s265 + $0x48] sm:$0xff] %vm799, %v770
        %810 = vst.msk [vmem:[%s265 + $0x50] sm:$0xff] %vm799, %v772
        %811 = vst.msk [vmem:[%s265 + $0x58] sm:$0xff] %vm799, %v774
        %812 = vst.msk [vmem:[%s265 + $0x60] sm:$0xff] %vm799, %v776
        %813 = vst.msk [vmem:[%s265 + $0x68] sm:$0xff] %vm799, %v778
        %814 = vst.msk [vmem:[%s265 + $0x70] sm:$0xff] %vm799, %v780
        %815 = vst.msk [vmem:[%s265 + $0x78] sm:$0xff] %vm799, %v782
        %s816 = sand.u32 %s104, 1
        %s817 = scalar_lea.sflag [#allocation3], %s816
        %s818 = sand.u32 %s104, 1
        %s819 = smul.addr %s818, 64
        %s820 = scalar_lea.vmem [#allocation2], %s819
        %s821 = sand.u32 %s130, 1
        %s822 = scalar_lea.sflag [#allocation5], %s821
        %s823 = sand.u32 %s130, 1
        %s824 = smul.addr %s823, 4
        %s825 = scalar_lea.vmem [#allocation4], %s824
        %p826 = scmp.lt.s32.totalorder %s23, 1
        %s827 = scalar_select %p826, %s23, 1
        %s828 = smul.addr %s827, 16
        %s829 = smul.addr %s828, 8
        %s830 = scalar_lea.vmem %s5, %s829
        // Predicated region
        $region33: #{tpu_custom_call.1} parent=31 // pred_check
          %p831 = pneg %p114
        $region34: #{tpu_custom_call.1} parent=31 // pred_check_branch
          %833 = sbr.rel (%p831) target = $region36
        $region35: #{tpu_custom_call.1} parent=31 // pred_region
          %s835 = ssub.s32 1024, 1024
          %836 = vsyncadd %s817, %s835
          %s837 = smul.addr %s23, 16
          %s838 = smul.addr %s837, 64
          %s839 = scalar_lea.hbm %s3, %s838
          %s840 = sshll.u32 %s820, 4
          %s841 = int_to_ptr.vmem [resolvable:$true] %s840
          %846 = dma.vmem_to_hbm [thread:$0]  %s841, 1024, %s839, %s817, 64, 64, 4
        $region36: #{tpu_custom_call.1} parent=31 // pred_fallthru
          _
        // Predicated region
        $region37: #{tpu_custom_call.1} parent=31 // pred_check
          %p847 = pneg %p140
        $region38: #{tpu_custom_call.1} parent=31 // pred_check_branch
          %849 = sbr.rel (%p847) target = $region40
        $region39: #{tpu_custom_call.1} parent=31 // pred_region
          %s851 = ssub.s32 64, 64
          %852 = vsyncadd %s822, %s851
          %s853 = smul.addr %s23, 64
          %s854 = scalar_lea.hbm %s4, %s853
          %s856 = sshll.u32 %s825, 4
          %s857 = int_to_ptr.vmem [resolvable:$true] %s856
          %859 = dma.vmem_to_hbm [thread:$0]  %s857, 64, %s854, %s822
        $region40: #{tpu_custom_call.1} parent=31 // pred_fallthru
          _
        // Predicated region
        $region41: #{tpu_custom_call.1} parent=31 // pred_check
          %p860 = pneg %p166
        $region42: #{tpu_custom_call.1} parent=31 // pred_check_branch
          %862 = sbr.rel (%p860) target = $region44
        $region43: #{tpu_custom_call.1} parent=31 // pred_region
          _
        $region44: #{tpu_custom_call.1} parent=31 // pred_fallthru
          _
      $region32: #{tpu_custom_call.1} parent=5 // pred_fallthru
        _
      %p863 = scmp.le.s32.totalorder 2, %s18
      // Predicated region
      $region45: #{tpu_custom_call.1} parent=5 // pred_check
        %p864 = pneg %p863
      $region46: #{tpu_custom_call.1} parent=5 // pred_check_branch
        %866 = sbr.rel (%p864) target = $region48
      $region47: #{tpu_custom_call.1} parent=5 // pred_region
        %s867 = ssub.s32 %s18, 2
        // Predicated region
        $region49: #{tpu_custom_call.1} parent=47 // pred_check
          %p868 = pneg %p120
        $region50: #{tpu_custom_call.1} parent=47 // pred_check_branch
          %870 = sbr.rel (%p868) target = $region52
        $region51: #{tpu_custom_call.1} parent=47 // pred_region
          %s871 = sand.u32 %s105, 1
          %s872 = scalar_lea.sflag [#allocation3], %s871
          %s873 = sand.u32 %s105, 1
          %s874 = smul.addr %s873, 64
          %s875 = scalar_lea.vmem [#allocation2], %s874
          %876 = dma.done %s872, 1024
        $region52: #{tpu_custom_call.1} parent=47 // pred_fallthru
          _
        // Predicated region
        $region53: #{tpu_custom_call.1} parent=47 // pred_check
          %p877 = pneg %p146
        $region54: #{tpu_custom_call.1} parent=47 // pred_check_branch
          %879 = sbr.rel (%p877) target = $region56
        $region55: #{tpu_custom_call.1} parent=47 // pred_region
          %s880 = sand.u32 %s131, 1
          %s881 = scalar_lea.sflag [#allocation5], %s880
          %s882 = sand.u32 %s131, 1
          %s883 = smul.addr %s882, 4
          %s884 = scalar_lea.vmem [#allocation4], %s883
          %885 = dma.done %s881, 64
        $region56: #{tpu_custom_call.1} parent=47 // pred_fallthru
          _
        // Predicated region
        $region57: #{tpu_custom_call.1} parent=47 // pred_check
          %p886 = pneg %p172
        $region58: #{tpu_custom_call.1} parent=47 // pred_check_branch
          %888 = sbr.rel (%p886) target = $region60
        $region59: #{tpu_custom_call.1} parent=47 // pred_region
          %p889 = scmp.lt.s32.totalorder %s24, 1
          %s890 = scalar_select %p889, %s24, 1
          %s891 = smul.addr %s890, 16
          %s892 = smul.addr %s891, 8
          %s893 = scalar_lea.vmem %s5, %s892
        $region60: #{tpu_custom_call.1} parent=47 // pred_fallthru
          _
      $region48: #{tpu_custom_call.1} parent=5 // pred_fallthru
        _
    $region6: #{tpu_custom_call.1} parent=1 // loop_footer
      %s22 = sadd.s32 1, %s18
    $region7: #{tpu_custom_call.1} parent=1 // loop_footer_branch
      %17 = sbr.rel target = $region3
    $region8: #{tpu_custom_call.1} parent=1 // loop_exit
      _
    %894 = vsyncpa [#allocation3], 1
    %s895 = scalar_lea.sflag [#allocation3], 1
    %896 = vsyncpa %s895, 1
    %897 = vsyncpa [#allocation5], 1
    %s898 = scalar_lea.sflag [#allocation5], 1
    %899 = vsyncpa %s898, 1

</llo_original>
